<compile_context>
chip_gen: v7x
topology: tpu7x:2x2x1
jax: 0.10.0
libtpu: 0.0.40
codegen_flags: <defaults>
</compile_context>

<pallas_src>
import jax
import jax.numpy as jnp
from jax.experimental import pallas as pl
from jax.experimental.pallas import tpu as pltpu

EPS = 1e-5


def _round_up(n, m):
    return ((n + m - 1) // m) * m


def _vmem_limit(tiled_bytes, resident_bytes):
    # Double-buffer only the batch-tiled blocks; weight blocks with constant
    # index maps stay resident (single buffer).  Add compiler slack; cap well
    # inside v7x's 64 MiB/TC (never binding on v5e/v6e's 128 MiB at these sizes).
    est = 2 * tiled_bytes + resident_bytes + (6 << 20)
    return int(min(max(est, 12 << 20), 40 << 20))


# ----------------------------------------------------------------------------
# Pass 1: Linear1 (bf16 MXU, f32 acc) + per-tile partial batch statistics.
#   outputs: h (bf16), stats[t, 0, :] = sum over tile, stats[t, 1, :] = sum sq.
# Padded (zero) batch rows contribute nothing to either partial sum; the glue
# divides by the true batch size, so padding never perturbs the statistics.
# ----------------------------------------------------------------------------
def _linear1_stats_kernel(x_ref, w1_ref, h_ref, stats_ref):
    h = jnp.dot(x_ref[...], w1_ref[...], preferred_element_type=jnp.float32)
    h_ref[...] = h.astype(jnp.bfloat16)          # bf16 intermediate storage

    s = jnp.sum(h, axis=0, keepdims=True)        # (1, hidden), f32
    q = jnp.sum(h * h, axis=0, keepdims=True)    # (1, hidden), f32
    row = jax.lax.broadcasted_iota(jnp.int32, (8, h.shape[1]), 0)
    # rows 0/1 carry sum / sum-of-squares; rows 2..7 are zero padding so the
    # stats block is a clean (8, lane-dense) tile.
    stats_ref[0, :, :] = jnp.where(row == 0, s, 0.0) + jnp.where(row == 1, q, 0.0)


# ----------------------------------------------------------------------------
# Pass 2: BN apply + ReLU (f32 VPU) + Linear2 (bf16 MXU) + bias.
# ----------------------------------------------------------------------------
def _bn_relu_linear2_kernel(h_ref, a_ref, b_ref, w2_ref, b2_ref, o_ref):
    h = h_ref[...].astype(jnp.float32)
    act = jnp.maximum(h * a_ref[...] + b_ref[...], 0.0)
    y = jnp.dot(act.astype(jnp.bfloat16), w2_ref[...],
                preferred_element_type=jnp.float32)
    o_ref[...] = (y + b2_ref[...]).astype(o_ref.dtype)


def prediction_mlp_forward(x, params, *, block_rows=None):
    """x: (B, C, H, W) or (B, in_dim) float32 -> (B, out_dim) float32."""
    w1, b1, gamma, beta, w2, b2 = params
    del b1  # Linear1 bias is exactly cancelled by BatchNorm's mean subtraction.

    x2d = x.reshape(x.shape[0], -1).astype(jnp.float32)   # torch.flatten(x, 1)
    B, in_dim = x2d.shape
    hidden_dim = w1.shape[1]
    out_dim = w2.shape[1]

    # bf16 storage dtype for matmul operands (halves weight/activation DMA,
    # fast bf16 MXU path on every TPU generation).  BN/ReLU math stays f32.
    x_bf = x2d.astype(jnp.bfloat16)
    w1_bf = w1.astype(jnp.bfloat16)
    w2_bf = w2.astype(jnp.bfloat16)
    gamma = gamma.reshape(1, hidden_dim).astype(jnp.float32)
    beta = beta.reshape(1, hidden_dim).astype(jnp.float32)
    b2 = b2.reshape(1, out_dim).astype(jnp.float32)

    # ---- batch tiling --------------------------------------------------------
    if block_rows is None:
        # Whole batch as one tile when small (no padding / slicing), otherwise
        # 256 rows: multiple of 128 (MXU M-alignment) and past the measured
        # pipeline-efficiency knee for mem-bound tiles.
        tb = B if B <= 256 else 256
    else:
        tb = max(16, _round_up(block_rows, 16))   # bf16 sublane packing
        tb = B if tb >= B else tb
    Bp = _round_up(B, tb)
    if Bp != B:
        x_bf = jnp.pad(x_bf, ((0, Bp - B), (0, 0)))   # zero rows: stat-neutral
    nt = Bp // tb

    # ----------------------------- pass 1 -----------------------------------
    vmem1 = _vmem_limit(
        tiled_bytes=tb * in_dim * 2 + tb * hidden_dim * 2 + 8 * hidden_dim * 4,
        resident_bytes=in_dim * hidden_dim * 2)
    h, stats = pl.pallas_call(
        _linear1_stats_kernel,
        out_shape=(
            jax.ShapeDtypeStruct((Bp, hidden_dim), jnp.bfloat16),
            jax.ShapeDtypeStruct((nt, 8, hidden_dim), jnp.float32),
        ),
        grid=(nt,),
        in_specs=[
            pl.BlockSpec((tb, in_dim), lambda t: (t, 0)),
            pl.BlockSpec((in_dim, hidden_dim), lambda t: (0, 0)),   # resident
        ],
        out_specs=(
            pl.BlockSpec((tb, hidden_dim), lambda t: (t, 0)),
            pl.BlockSpec((1, 8, hidden_dim), lambda t: (t, 0, 0)),
        ),
        compiler_params=pltpu.CompilerParams(
            dimension_semantics=("parallel",),   # per-tile partials -> no serial dep
            vmem_limit_bytes=vmem1),
    )(x_bf, w1_bf)

    # -------- tiny XLA glue: fold batch stats into BN scale/shift ------------
    total_sum = jnp.sum(stats[:, 0, :], axis=0, keepdims=True)
    total_ssq = jnp.sum(stats[:, 1, :], axis=0, keepdims=True)
    mean = total_sum / B
    # E[h^2] - mean^2 in f32; clamped at 0.  Fine here since Linear1's bias is
    # folded out, so feature means stay small relative to the std.
    var = jnp.maximum(total_ssq / B - mean * mean, 0.0)
    a = gamma * jax.lax.rsqrt(var + EPS)
    bshift = beta - mean * a

    # ----------------------------- pass 2 -----------------------------------
    vmem2 = _vmem_limit(
        tiled_bytes=tb * hidden_dim * 2 + tb * out_dim * 4,
        resident_bytes=2 * hidden_dim * 4 + hidden_dim * out_dim * 2 + out_dim * 4)
    out = pl.pallas_call(
        _bn_relu_linear2_kernel,
        out_shape=jax.ShapeDtypeStruct((Bp, out_dim), jnp.float32),
        grid=(nt,),
        in_specs=[
            pl.BlockSpec((tb, hidden_dim), lambda t: (t, 0)),
            pl.BlockSpec((1, hidden_dim), lambda t: (0, 0)),
            pl.BlockSpec((1, hidden_dim), lambda t: (0, 0)),
            pl.BlockSpec((hidden_dim, out_dim), lambda t: (0, 0)),  # resident
            pl.BlockSpec((1, out_dim), lambda t: (0, 0)),
        ],
        out_specs=pl.BlockSpec((tb, out_dim), lambda t: (t, 0)),
        compiler_params=pltpu.CompilerParams(
            dimension_semantics=("parallel",),   # megacore on v7x
            vmem_limit_bytes=vmem2),
    )(h, a, bshift, w2_bf, b2)

    return out if Bp == B else out[:B]


def init_params(key, in_dim, hidden_dim, out_dim):
    """Init mirroring PyTorch defaults (Linear: U(+-1/sqrt(fan_in))); gamma/beta
    perturbed from BatchNorm's (1, 0) default so the affine path is exercised."""
    k1, k2, k3, k4, k5, k6 = jax.random.split(key, 6)
    lim1 = 1.0 / jnp.sqrt(in_dim)
    lim2 = 1.0 / jnp.sqrt(hidden_dim)
    w1 = jax.random.uniform(k1, (in_dim, hidden_dim), jnp.float32, -lim1, lim1)
    b1 = jax.random.uniform(k2, (1, hidden_dim), jnp.float32, -lim1, lim1)
    gamma = 1.0 + 0.1 * jax.random.normal(k5, (1, hidden_dim), jnp.float32)
    beta = 0.1 * jax.random.normal(k6, (1, hidden_dim), jnp.float32)
    w2 = jax.random.uniform(k3, (hidden_dim, out_dim), jnp.float32, -lim2, lim2)
    b2 = jax.random.uniform(k4, (1, out_dim), jnp.float32, -lim2, lim2)
    return (w1, b1, gamma, beta, w2, b2)


def reference_forward(x, params):
    """Pure-JAX reference with identical semantics, mirroring the kernel's bf16
    quantization of matmul operands and of the stored intermediate h.
    Note: Linear1's bias is omitted here as well -- BatchNorm subtracts the
    batch mean, so adding b1 before BN is mathematically a no-op."""
    w1, b1, gamma, beta, w2, b2 = params
    del b1
    x2d = x.reshape(x.shape[0], -1)
    xq = x2d.astype(jnp.bfloat16).astype(jnp.float32)
    w1q = w1.astype(jnp.bfloat16).astype(jnp.float32)
    w2q = w2.astype(jnp.bfloat16).astype(jnp.float32)

    h = xq @ w1q                                           # f32 (stats source)
    mean = jnp.mean(h, axis=0, keepdims=True)
    var = jnp.mean((h - mean) ** 2, axis=0, keepdims=True)  # biased variance
    a = gamma.reshape(1, -1) * jax.lax.rsqrt(var + EPS)
    b = beta.reshape(1, -1) - mean * a

    hq = h.astype(jnp.bfloat16).astype(jnp.float32)        # bf16 h storage
    act = jnp.maximum(hq * a + b, 0.0)
    actq = act.astype(jnp.bfloat16).astype(jnp.float32)    # bf16 MXU LHS
    return actq @ w2q + b2.reshape(1, -1)


if __name__ == "__main__":
    # Small shapes consistent with the module: flatten(32, 4, 16, 16) -> 1024,
    # hidden 256, out 512 (all lane-dense multiples of 128).
    B, C, H, W = 32, 4, 16, 16
    in_dim, hidden_dim, out_dim = C * H * W, 256, 512

    key = jax.random.PRNGKey(0)
    kx, kp = jax.random.split(key)
    x = jax.random.normal(kx, (B, C, H, W), jnp.float32)
    params = init_params(kp, in_dim, hidden_dim, out_dim)

    y_ref = reference_forward(x, params)

    # Default path: whole batch as one tile (no padding, no output slice).
    y1 = jax.block_until_ready(prediction_mlp_forward(x, params))
    # Forced multi-tile path: exercises the pipelined grid + per-tile partial
    # statistics reduction (test-only tile size).
    y2 = jax.block_until_ready(prediction_mlp_forward(x, params, block_rows=16))

    for name, y in (("single-tile", y1), ("multi-tile", y2)):
        assert y.shape == (B, out_dim), (name, y.shape)
        max_err = float(jnp.max(jnp.abs(y - y_ref)))
        assert jnp.allclose(y, y_ref, atol=1e-2, rtol=1e-2), \
            f"{name}: mismatch vs reference (max abs err {max_err})"

    print("KERNEL_OK")
</pallas_src>

<mosaic_0001>
module attributes {stable_mosaic.version = 11 : i64} {
  func.func @_linear1_stats_kernel(%arg0: i32, %arg1: memref<32x1024xbf16, #tpu.memory_space<vmem>>, %arg2: memref<1024x256xbf16, #tpu.memory_space<vmem>>, %arg3: memref<32x256xbf16, #tpu.memory_space<vmem>>, %arg4: memref<1x8x256xf32, #tpu.memory_space<vmem>>) attributes {dimension_semantics = [#tpu.dimension_semantics<parallel>], iteration_bounds = array<i64: 1>, scalar_prefetch = 0 : i64, scratch_operands = 0 : i64, tpu.core_type = #tpu.core_type<tc>, window_params = [{transform_indices = @transform_0, window_bounds = array<i64: 32, 1024>}, {pipeline_mode = #tpu.pipeline_mode<synchronous>, transform_indices = @transform_1, window_bounds = array<i64: 1024, 256>}, {transform_indices = @transform_2, window_bounds = array<i64: 32, 256>}, {transform_indices = @transform_3, window_bounds = array<i64: 1, 8, 256>}]} {
    %c0 = arith.constant 0 : index
    %c0_0 = arith.constant 0 : index
    %0 = vector.load %arg1[%c0, %c0_0] : memref<32x1024xbf16, #tpu.memory_space<vmem>>, vector<32x1024xbf16>
    %c0_1 = arith.constant 0 : index
    %c0_2 = arith.constant 0 : index
    %1 = vector.load %arg2[%c0_1, %c0_2] : memref<1024x256xbf16, #tpu.memory_space<vmem>>, vector<1024x256xbf16>
    %cst = arith.constant dense<0.000000e+00> : vector<32x256xf32>
    %2 = tpu.matmul %0, %1, %cst {dimension_numbers = #tpu.dot_dimension_numbers<[1], [0], [0], [1], [0, 0, 1, 1], [], []>} : vector<32x1024xbf16>, vector<1024x256xbf16>, vector<32x256xf32> -> vector<32x256xf32>
    %3 = arith.truncf %2 : vector<32x256xf32> to vector<32x256xbf16>
    %c0_3 = arith.constant 0 : index
    %c0_4 = arith.constant 0 : index
    %4 = vector.load %arg3[%c0_3, %c0_4] : memref<32x256xbf16, #tpu.memory_space<vmem>>, vector<32x256xbf16>
    tpu.vector_store %arg3[%c0_3, %c0_4], %3 {strides = array<i32>} : memref<32x256xbf16, #tpu.memory_space<vmem>>, vector<32x256xbf16>,
    %cst_5 = arith.constant dense<0.000000e+00> : vector<256xf32>
    %5 = vector.multi_reduction <add>, %2, %cst_5 [0] : vector<32x256xf32> to vector<256xf32>
    %6 = vector.shape_cast %5 : vector<256xf32> to vector<1x256xf32>
    %7 = arith.mulf %2, %2 : vector<32x256xf32>
    %cst_6 = arith.constant dense<0.000000e+00> : vector<256xf32>
    %8 = vector.multi_reduction <add>, %7, %cst_6 [0] : vector<32x256xf32> to vector<256xf32>
    %9 = vector.shape_cast %8 : vector<256xf32> to vector<1x256xf32>
    %10 = tpu.iota {dimensions = array<i32: 0>} : vector<8x256xi32>
    %c0_i32 = arith.constant 0 : i32
    %11 = vector.broadcast %c0_i32 : i32 to vector<8x256xi32>
    %12 = arith.cmpi eq, %10, %11 : vector<8x256xi32>
    %cst_7 = arith.constant 0.000000e+00 : f32
    %13 = vector.shape_cast %6 : vector<1x256xf32> to vector<1x256xf32>
    %14 = vector.broadcast %13 : vector<1x256xf32> to vector<8x256xf32>
    %15 = vector.broadcast %cst_7 : f32 to vector<8x256xf32>
    %16 = arith.select %12, %14, %15 : vector<8x256xi1>, vector<8x256xf32>
    %c1_i32 = arith.constant 1 : i32
    %17 = vector.broadcast %c1_i32 : i32 to vector<8x256xi32>
    %18 = arith.cmpi eq, %10, %17 : vector<8x256xi32>
    %cst_8 = arith.constant 0.000000e+00 : f32
    %19 = vector.shape_cast %9 : vector<1x256xf32> to vector<1x256xf32>
    %20 = vector.broadcast %19 : vector<1x256xf32> to vector<8x256xf32>
    %21 = vector.broadcast %cst_8 : f32 to vector<8x256xf32>
    %22 = arith.select %18, %20, %21 : vector<8x256xi1>, vector<8x256xf32>
    %23 = arith.addf %16, %22 : vector<8x256xf32>
    %c0_9 = arith.constant 0 : index
    %c0_10 = arith.constant 0 : index
    %c0_11 = arith.constant 0 : index
    %24 = vector.load %arg4[%c0_9, %c0_10, %c0_11] : memref<1x8x256xf32, #tpu.memory_space<vmem>>, vector<1x8x256xf32>
    %25 = vector.shape_cast %24 : vector<1x8x256xf32> to vector<8x256xf32>
    %26 = vector.shape_cast %23 : vector<8x256xf32> to vector<1x8x256xf32>
    tpu.vector_store %arg4[%c0_9, %c0_10, %c0_11], %26 {strides = array<i32>} : memref<1x8x256xf32, #tpu.memory_space<vmem>>, vector<1x8x256xf32>,
    return
  }
  func.func @transform_0(%arg0: i32) -> (i32, i32) {
    %c0_i32 = arith.constant 0 : i32
    %c0_i32_0 = arith.constant 0 : i32
    return %arg0, %c0_i32 : i32, i32
  }
  func.func @transform_1(%arg0: i32) -> (i32, i32) {
    %c0_i32 = arith.constant 0 : i32
    %c0_i32_0 = arith.constant 0 : i32
    %c0_i32_1 = arith.constant 0 : i32
    return %c0_i32, %c0_i32_0 : i32, i32
  }
  func.func @transform_2(%arg0: i32) -> (i32, i32) {
    %c0_i32 = arith.constant 0 : i32
    %c0_i32_0 = arith.constant 0 : i32
    return %arg0, %c0_i32 : i32, i32
  }
  func.func @transform_3(%arg0: i32) -> (i32, i32, i32) {
    %c0_i32 = arith.constant 0 : i32
    %c0_i32_0 = arith.constant 0 : i32
    %c0_i32_1 = arith.constant 0 : i32
    return %arg0, %c0_i32, %c0_i32_0 : i32, i32, i32
  }
}

</mosaic_0001>

<llo_original>
// kernel: tpu_custom_call.1
$region0: #{tpu_custom_call.1}
  #allocation0 [shape = 'u32[]', space=smem, size = 0x4, offset = 0x4, fixed_abs, tag = 'smem constant byte address 0x4 - core index']
  #allocation1 [shape = 'u32[144,128]{1,0:T(1,128)}', space=vmem, size = 0x12000, scoped, tag = 'internal scratch']
  %s0 = inlined_call_operand.hbm [shape: bf16[32,1024], index: 0, kind: input, shape index: {}]
  %s1 = inlined_call_operand.hbm [shape: bf16[1024,256], index: 1, kind: input, shape index: {}]
  %s2 = inlined_call_operand.hbm [shape: bf16[32,256], index: 2, kind: output, shape index: {0}]
  %s3 = inlined_call_operand.hbm [shape: f32[1,8,256], index: 3, kind: output, shape index: {1}]
  %4 = xla_tuple %s2, %s3
  %s5 = sld [smem:[#allocation0]]
  $region34: #{tpu_custom_call.1} parent=0
    _
  %s7 = ssub.s32 1, %s5
  %s8 = scalar_select 0, %s7, %s5
  $region1: #{tpu_custom_call.1} parent=0
    #allocation2 [shape = 'u8[65536]{0}', space=vmem, size = 0x10000, scoped, tag = 'input window, operand 0, single buffered']
    #allocation3 [shape = 's32[1]{0}', space=sflag, size = 0x4, scoped, tag = 'scoped memory for tpu_custom_call.1']
    #allocation4 [shape = 's32[1]{0}', space=sflag, size = 0x4, scoped, tag = 'scoped memory for tpu_custom_call.1']
    #allocation5 [shape = 'u8[524288]{0}', space=vmem, size = 0x80000, scoped, tag = 'input window, operand 1, single buffered']
    #allocation6 [shape = 's32[1]{0}', space=sflag, size = 0x4, scoped, tag = 'scoped memory for tpu_custom_call.1']
    #allocation7 [shape = 'u8[16384]{0}', space=vmem, size = 0x4000, scoped, tag = 'output window, operand 0, single buffered']
    #allocation8 [shape = 'u8[8192]{0}', space=vmem, size = 0x2000, scoped, tag = 'output window, operand 1, single buffered']
    #allocation9 [shape = 's32[1]{0}', space=sflag, size = 0x4, scoped, tag = 'scoped memory for tpu_custom_call.1']
    %9 = vsyncpa [#allocation3], 0
    %10 = vsyncpa [#allocation6], 0
    %11 = vsyncpa [#allocation4], 0
    %12 = vsyncpa [#allocation9], 0
    // Predicated region
    $region2: #{tpu_custom_call.1} parent=1 // pred_check
      _
    $region3: #{tpu_custom_call.1} parent=1 // pred_check_branch
      %14 = sbr.rel (0) target = $region5
    $region4: #{tpu_custom_call.1} parent=1 // pred_region
      %s16 = ssub.s32 2048, 2048
      %17 = vsyncadd [#allocation3], %s16
      %s18 = sshll.u32 [#allocation2], 4
      %s19 = int_to_ptr.vmem [resolvable:$true] %s18
      %24 = dma.hbm_to_vmem [thread:$0]  %s0, 2048, %s19, [#allocation3], 512, 512, 32
    $region5: #{tpu_custom_call.1} parent=1 // pred_fallthru
      _
    // Predicated region
    $region6: #{tpu_custom_call.1} parent=1 // pred_check
      _
    $region7: #{tpu_custom_call.1} parent=1 // pred_check_branch
      %26 = sbr.rel (0) target = $region9
    $region8: #{tpu_custom_call.1} parent=1 // pred_region
      %s28 = ssub.s32 16384, 16384
      %29 = vsyncadd [#allocation6], %s28
      %s30 = sshll.u32 [#allocation5], 4
      %s31 = int_to_ptr.vmem [resolvable:$true] %s30
      %36 = dma.hbm_to_vmem [thread:$0]  %s1, 16384, %s31, [#allocation6], 128, 128, 8
    $region9: #{tpu_custom_call.1} parent=1 // pred_fallthru
      _
    // Predicated region
    $region10: #{tpu_custom_call.1} parent=1 // pred_check
      _
    $region11: #{tpu_custom_call.1} parent=1 // pred_check_branch
      %38 = sbr.rel (0) target = $region13
    $region12: #{tpu_custom_call.1} parent=1 // pred_region
      %39 = dma.done [#allocation3], 2048
    $region13: #{tpu_custom_call.1} parent=1 // pred_fallthru
      _
    // Predicated region
    $region14: #{tpu_custom_call.1} parent=1 // pred_check
      _
    $region15: #{tpu_custom_call.1} parent=1 // pred_check_branch
      %41 = sbr.rel (0) target = $region17
    $region16: #{tpu_custom_call.1} parent=1 // pred_region
      %42 = dma.done [#allocation6], 16384
    $region17: #{tpu_custom_call.1} parent=1 // pred_fallthru
      _
    %v43 = vld [vmem:[#allocation2] sm:$0xff]
    %v44 = vld [vmem:[#allocation2 + $0x8] sm:$0xff]
    %v45 = vld [vmem:[#allocation2 + $0x10] sm:$0xff]
    %v46 = vld [vmem:[#allocation2 + $0x18] sm:$0xff]
    %v47 = vld [vmem:[#allocation2 + $0x20] sm:$0xff]
    %v48 = vld [vmem:[#allocation2 + $0x28] sm:$0xff]
    %v49 = vld [vmem:[#allocation2 + $0x30] sm:$0xff]
    %v50 = vld [vmem:[#allocation2 + $0x38] sm:$0xff]
    %v51 = vld [vmem:[#allocation2 + $0x40] sm:$0xff]
    %v52 = vld [vmem:[#allocation2 + $0x48] sm:$0xff]
    %v53 = vld [vmem:[#allocation2 + $0x50] sm:$0xff]
    %v54 = vld [vmem:[#allocation2 + $0x58] sm:$0xff]
    %v55 = vld [vmem:[#allocation2 + $0x60] sm:$0xff]
    %v56 = vld [vmem:[#allocation2 + $0x68] sm:$0xff]
    %v57 = vld [vmem:[#allocation2 + $0x70] sm:$0xff]
    %v58 = vld [vmem:[#allocation2 + $0x78] sm:$0xff]
    %v59 = vld [vmem:[#allocation5] sm:$0xff]
    %v60 = vld [vmem:[#allocation5 + $0x8] sm:$0xff]
    %v61 = vld [vmem:[#allocation5 + $0x10] sm:$0xff]
    %v62 = vld [vmem:[#allocation5 + $0x18] sm:$0xff]
    %v63 = vld [vmem:[#allocation5 + $0x20] sm:$0xff]
    %v64 = vld [vmem:[#allocation5 + $0x28] sm:$0xff]
    %v65 = vld [vmem:[#allocation5 + $0x30] sm:$0xff]
    %v66 = vld [vmem:[#allocation5 + $0x38] sm:$0xff]
    %v67 = vld [vmem:[#allocation5 + $0x40] sm:$0xff]
    %v68 = vld [vmem:[#allocation5 + $0x48] sm:$0xff]
    %v69 = vld [vmem:[#allocation5 + $0x50] sm:$0xff]
    %v70 = vld [vmem:[#allocation5 + $0x58] sm:$0xff]
    %v71 = vld [vmem:[#allocation5 + $0x60] sm:$0xff]
    %v72 = vld [vmem:[#allocation5 + $0x68] sm:$0xff]
    %v73 = vld [vmem:[#allocation5 + $0x70] sm:$0xff]
    %v74 = vld [vmem:[#allocation5 + $0x78] sm:$0xff]
    %v75 = vld [vmem:[#allocation5 + $0x80] sm:$0xff]
    %v76 = vld [vmem:[#allocation5 + $0x88] sm:$0xff]
    %v77 = vld [vmem:[#allocation5 + $0x90] sm:$0xff]
    %v78 = vld [vmem:[#allocation5 + $0x98] sm:$0xff]
    %v79 = vld [vmem:[#allocation5 + $0xa0] sm:$0xff]
    %v80 = vld [vmem:[#allocation5 + $0xa8] sm:$0xff]
    %v81 = vld [vmem:[#allocation5 + $0xb0] sm:$0xff]
    %v82 = vld [vmem:[#allocation5 + $0xb8] sm:$0xff]
    %v83 = vld [vmem:[#allocation5 + $0xc0] sm:$0xff]
    %v84 = vld [vmem:[#allocation5 + $0xc8] sm:$0xff]
    %v85 = vld [vmem:[#allocation5 + $0xd0] sm:$0xff]
    %v86 = vld [vmem:[#allocation5 + $0xd8] sm:$0xff]
    %v87 = vld [vmem:[#allocation5 + $0xe0] sm:$0xff]
    %v88 = vld [vmem:[#allocation5 + $0xe8] sm:$0xff]
    %v89 = vld [vmem:[#allocation5 + $0xf0] sm:$0xff]
    %v90 = vld [vmem:[#allocation5 + $0xf8] sm:$0xff]
    %v91 = vld [vmem:[#allocation5 + $0x100] sm:$0xff]
    %v92 = vld [vmem:[#allocation5 + $0x108] sm:$0xff]
    %v93 = vld [vmem:[#allocation5 + $0x110] sm:$0xff]
    %v94 = vld [vmem:[#allocation5 + $0x118] sm:$0xff]
    %v95 = vld [vmem:[#allocation5 + $0x120] sm:$0xff]
    %v96 = vld [vmem:[#allocation5 + $0x128] sm:$0xff]
    %v97 = vld [vmem:[#allocation5 + $0x130] sm:$0xff]
    %v98 = vld [vmem:[#allocation5 + $0x138] sm:$0xff]
    %v99 = vld [vmem:[#allocation5 + $0x140] sm:$0xff]
    %v100 = vld [vmem:[#allocation5 + $0x148] sm:$0xff]
    %v101 = vld [vmem:[#allocation5 + $0x150] sm:$0xff]
    %v102 = vld [vmem:[#allocation5 + $0x158] sm:$0xff]
    %v103 = vld [vmem:[#allocation5 + $0x160] sm:$0xff]
    %v104 = vld [vmem:[#allocation5 + $0x168] sm:$0xff]
    %v105 = vld [vmem:[#allocation5 + $0x170] sm:$0xff]
    %v106 = vld [vmem:[#allocation5 + $0x178] sm:$0xff]
    %v107 = vld [vmem:[#allocation5 + $0x180] sm:$0xff]
    %v108 = vld [vmem:[#allocation5 + $0x188] sm:$0xff]
    %v109 = vld [vmem:[#allocation5 + $0x190] sm:$0xff]
    %v110 = vld [vmem:[#allocation5 + $0x198] sm:$0xff]
    %v111 = vld [vmem:[#allocation5 + $0x1a0] sm:$0xff]
    %v112 = vld [vmem:[#allocation5 + $0x1a8] sm:$0xff]
    %v113 = vld [vmem:[#allocation5 + $0x1b0] sm:$0xff]
    %v114 = vld [vmem:[#allocation5 + $0x1b8] sm:$0xff]
    %v115 = vld [vmem:[#allocation5 + $0x1c0] sm:$0xff]
    %v116 = vld [vmem:[#allocation5 + $0x1c8] sm:$0xff]
    %v117 = vld [vmem:[#allocation5 + $0x1d0] sm:$0xff]
    %v118 = vld [vmem:[#allocation5 + $0x1d8] sm:$0xff]
    %v119 = vld [vmem:[#allocation5 + $0x1e0] sm:$0xff]
    %v120 = vld [vmem:[#allocation5 + $0x1e8] sm:$0xff]
    %v121 = vld [vmem:[#allocation5 + $0x1f0] sm:$0xff]
    %v122 = vld [vmem:[#allocation5 + $0x1f8] sm:$0xff]
    %v123 = vld [vmem:[#allocation5 + $0x200] sm:$0xff]
    %v124 = vld [vmem:[#allocation5 + $0x208] sm:$0xff]
    %v125 = vld [vmem:[#allocation5 + $0x210] sm:$0xff]
    %v126 = vld [vmem:[#allocation5 + $0x218] sm:$0xff]
    %v127 = vld [vmem:[#allocation5 + $0x220] sm:$0xff]
    %v128 = vld [vmem:[#allocation5 + $0x228] sm:$0xff]
    %v129 = vld [vmem:[#allocation5 + $0x230] sm:$0xff]
    %v130 = vld [vmem:[#allocation5 + $0x238] sm:$0xff]
    %v131 = vld [vmem:[#allocation5 + $0x240] sm:$0xff]
    %v132 = vld [vmem:[#allocation5 + $0x248] sm:$0xff]
    %v133 = vld [vmem:[#allocation5 + $0x250] sm:$0xff]
    %v134 = vld [vmem:[#allocation5 + $0x258] sm:$0xff]
    %v135 = vld [vmem:[#allocation5 + $0x260] sm:$0xff]
    %v136 = vld [vmem:[#allocation5 + $0x268] sm:$0xff]
    %v137 = vld [vmem:[#allocation5 + $0x270] sm:$0xff]
    %v138 = vld [vmem:[#allocation5 + $0x278] sm:$0xff]
    %v139 = vld [vmem:[#allocation5 + $0x280] sm:$0xff]
    %v140 = vld [vmem:[#allocation5 + $0x288] sm:$0xff]
    %v141 = vld [vmem:[#allocation5 + $0x290] sm:$0xff]
    %v142 = vld [vmem:[#allocation5 + $0x298] sm:$0xff]
    %v143 = vld [vmem:[#allocation5 + $0x2a0] sm:$0xff]
    %v144 = vld [vmem:[#allocation5 + $0x2a8] sm:$0xff]
    %v145 = vld [vmem:[#allocation5 + $0x2b0] sm:$0xff]
    %v146 = vld [vmem:[#allocation5 + $0x2b8] sm:$0xff]
    %v147 = vld [vmem:[#allocation5 + $0x2c0] sm:$0xff]
    %v148 = vld [vmem:[#allocation5 + $0x2c8] sm:$0xff]
    %v149 = vld [vmem:[#allocation5 + $0x2d0] sm:$0xff]
    %v150 = vld [vmem:[#allocation5 + $0x2d8] sm:$0xff]
    %v151 = vld [vmem:[#allocation5 + $0x2e0] sm:$0xff]
    %v152 = vld [vmem:[#allocation5 + $0x2e8] sm:$0xff]
    %v153 = vld [vmem:[#allocation5 + $0x2f0] sm:$0xff]
    %v154 = vld [vmem:[#allocation5 + $0x2f8] sm:$0xff]
    %v155 = vld [vmem:[#allocation5 + $0x300] sm:$0xff]
    %v156 = vld [vmem:[#allocation5 + $0x308] sm:$0xff]
    %v157 = vld [vmem:[#allocation5 + $0x310] sm:$0xff]
    %v158 = vld [vmem:[#allocation5 + $0x318] sm:$0xff]
    %v159 = vld [vmem:[#allocation5 + $0x320] sm:$0xff]
    %v160 = vld [vmem:[#allocation5 + $0x328] sm:$0xff]
    %v161 = vld [vmem:[#allocation5 + $0x330] sm:$0xff]
    %v162 = vld [vmem:[#allocation5 + $0x338] sm:$0xff]
    %v163 = vld [vmem:[#allocation5 + $0x340] sm:$0xff]
    %v164 = vld [vmem:[#allocation5 + $0x348] sm:$0xff]
    %v165 = vld [vmem:[#allocation5 + $0x350] sm:$0xff]
    %v166 = vld [vmem:[#allocation5 + $0x358] sm:$0xff]
    %v167 = vld [vmem:[#allocation5 + $0x360] sm:$0xff]
    %v168 = vld [vmem:[#allocation5 + $0x368] sm:$0xff]
    %v169 = vld [vmem:[#allocation5 + $0x370] sm:$0xff]
    %v170 = vld [vmem:[#allocation5 + $0x378] sm:$0xff]
    %v171 = vld [vmem:[#allocation5 + $0x380] sm:$0xff]
    %v172 = vld [vmem:[#allocation5 + $0x388] sm:$0xff]
    %v173 = vld [vmem:[#allocation5 + $0x390] sm:$0xff]
    %v174 = vld [vmem:[#allocation5 + $0x398] sm:$0xff]
    %v175 = vld [vmem:[#allocation5 + $0x3a0] sm:$0xff]
    %v176 = vld [vmem:[#allocation5 + $0x3a8] sm:$0xff]
    %v177 = vld [vmem:[#allocation5 + $0x3b0] sm:$0xff]
    %v178 = vld [vmem:[#allocation5 + $0x3b8] sm:$0xff]
    %v179 = vld [vmem:[#allocation5 + $0x3c0] sm:$0xff]
    %v180 = vld [vmem:[#allocation5 + $0x3c8] sm:$0xff]
    %v181 = vld [vmem:[#allocation5 + $0x3d0] sm:$0xff]
    %v182 = vld [vmem:[#allocation5 + $0x3d8] sm:$0xff]
    %v183 = vld [vmem:[#allocation5 + $0x3e0] sm:$0xff]
    %v184 = vld [vmem:[#allocation5 + $0x3e8] sm:$0xff]
    %v185 = vld [vmem:[#allocation5 + $0x3f0] sm:$0xff]
    %v186 = vld [vmem:[#allocation5 + $0x3f8] sm:$0xff]
    %v203 = vunpack.c.l.b16 %v43
    %v204 = vunpack.c.h.b16 %v43
    %v205 = vunpack.c.l.b16 %v44
    %v206 = vunpack.c.h.b16 %v44
    %v207 = vunpack.c.l.b16 %v45
    %v208 = vunpack.c.h.b16 %v45
    %v209 = vunpack.c.l.b16 %v46
    %v210 = vunpack.c.h.b16 %v46
    %v211 = vunpack.c.l.b16 %v47
    %v212 = vunpack.c.h.b16 %v47
    %v213 = vunpack.c.l.b16 %v48
    %v214 = vunpack.c.h.b16 %v48
    %v215 = vunpack.c.l.b16 %v49
    %v216 = vunpack.c.h.b16 %v49
    %v217 = vunpack.c.l.b16 %v50
    %v218 = vunpack.c.h.b16 %v50
    %v219 = vunpack.c.l.b16 %v51
    %v220 = vunpack.c.h.b16 %v51
    %v221 = vunpack.c.l.b16 %v52
    %v222 = vunpack.c.h.b16 %v52
    %v223 = vunpack.c.l.b16 %v53
    %v224 = vunpack.c.h.b16 %v53
    %v225 = vunpack.c.l.b16 %v54
    %v226 = vunpack.c.h.b16 %v54
    %v227 = vunpack.c.l.b16 %v55
    %v228 = vunpack.c.h.b16 %v55
    %v229 = vunpack.c.l.b16 %v56
    %v230 = vunpack.c.h.b16 %v56
    %v231 = vunpack.c.l.b16 %v57
    %v232 = vunpack.c.h.b16 %v57
    %v233 = vunpack.c.l.b16 %v58
    %v234 = vunpack.c.h.b16 %v58
    %v235 = vpack.c.b16 %v211, %v203
    %v236 = vpack.c.b16 %v212, %v204
    %v237 = vpack.c.b16 %v213, %v205
    %v238 = vpack.c.b16 %v214, %v206
    %v239 = vpack.c.b16 %v215, %v207
    %v240 = vpack.c.b16 %v216, %v208
    %v241 = vpack.c.b16 %v217, %v209
    %v242 = vpack.c.b16 %v218, %v210
    %v243 = vpack.c.b16 %v227, %v219
    %v244 = vpack.c.b16 %v228, %v220
    %v245 = vpack.c.b16 %v229, %v221
    %v246 = vpack.c.b16 %v230, %v222
    %v247 = vpack.c.b16 %v231, %v223
    %v248 = vpack.c.b16 %v232, %v224
    %v249 = vpack.c.b16 %v233, %v225
    %v250 = vpack.c.b16 %v234, %v226
    %v395 = vunpack.c.l.b16 %v59
    %v396 = vunpack.c.h.b16 %v59
    %v397 = vunpack.c.l.b16 %v60
    %v398 = vunpack.c.h.b16 %v60
    %v399 = vunpack.c.l.b16 %v61
    %v400 = vunpack.c.h.b16 %v61
    %v401 = vunpack.c.l.b16 %v62
    %v402 = vunpack.c.h.b16 %v62
    %v403 = vunpack.c.l.b16 %v63
    %v404 = vunpack.c.h.b16 %v63
    %v405 = vunpack.c.l.b16 %v64
    %v406 = vunpack.c.h.b16 %v64
    %v407 = vunpack.c.l.b16 %v65
    %v408 = vunpack.c.h.b16 %v65
    %v409 = vunpack.c.l.b16 %v66
    %v410 = vunpack.c.h.b16 %v66
    %v411 = vunpack.c.l.b16 %v67
    %v412 = vunpack.c.h.b16 %v67
    %v413 = vunpack.c.l.b16 %v68
    %v414 = vunpack.c.h.b16 %v68
    %v415 = vunpack.c.l.b16 %v69
    %v416 = vunpack.c.h.b16 %v69
    %v417 = vunpack.c.l.b16 %v70
    %v418 = vunpack.c.h.b16 %v70
    %v419 = vunpack.c.l.b16 %v71
    %v420 = vunpack.c.h.b16 %v71
    %v421 = vunpack.c.l.b16 %v72
    %v422 = vunpack.c.h.b16 %v72
    %v423 = vunpack.c.l.b16 %v73
    %v424 = vunpack.c.h.b16 %v73
    %v425 = vunpack.c.l.b16 %v74
    %v426 = vunpack.c.h.b16 %v74
    %v427 = vunpack.c.l.b16 %v75
    %v428 = vunpack.c.h.b16 %v75
    %v429 = vunpack.c.l.b16 %v76
    %v430 = vunpack.c.h.b16 %v76
    %v431 = vunpack.c.l.b16 %v77
    %v432 = vunpack.c.h.b16 %v77
    %v433 = vunpack.c.l.b16 %v78
    %v434 = vunpack.c.h.b16 %v78
    %v435 = vunpack.c.l.b16 %v79
    %v436 = vunpack.c.h.b16 %v79
    %v437 = vunpack.c.l.b16 %v80
    %v438 = vunpack.c.h.b16 %v80
    %v439 = vunpack.c.l.b16 %v81
    %v440 = vunpack.c.h.b16 %v81
    %v441 = vunpack.c.l.b16 %v82
    %v442 = vunpack.c.h.b16 %v82
    %v443 = vunpack.c.l.b16 %v83
    %v444 = vunpack.c.h.b16 %v83
    %v445 = vunpack.c.l.b16 %v84
    %v446 = vunpack.c.h.b16 %v84
    %v447 = vunpack.c.l.b16 %v85
    %v448 = vunpack.c.h.b16 %v85
    %v449 = vunpack.c.l.b16 %v86
    %v450 = vunpack.c.h.b16 %v86
    %v451 = vunpack.c.l.b16 %v87
    %v452 = vunpack.c.h.b16 %v87
    %v453 = vunpack.c.l.b16 %v88
    %v454 = vunpack.c.h.b16 %v88
    %v455 = vunpack.c.l.b16 %v89
    %v456 = vunpack.c.h.b16 %v89
    %v457 = vunpack.c.l.b16 %v90
    %v458 = vunpack.c.h.b16 %v90
    %v459 = vunpack.c.l.b16 %v91
    %v460 = vunpack.c.h.b16 %v91
    %v461 = vunpack.c.l.b16 %v92
    %v462 = vunpack.c.h.b16 %v92
    %v463 = vunpack.c.l.b16 %v93
    %v464 = vunpack.c.h.b16 %v93
    %v465 = vunpack.c.l.b16 %v94
    %v466 = vunpack.c.h.b16 %v94
    %v467 = vunpack.c.l.b16 %v95
    %v468 = vunpack.c.h.b16 %v95
    %v469 = vunpack.c.l.b16 %v96
    %v470 = vunpack.c.h.b16 %v96
    %v471 = vunpack.c.l.b16 %v97
    %v472 = vunpack.c.h.b16 %v97
    %v473 = vunpack.c.l.b16 %v98
    %v474 = vunpack.c.h.b16 %v98
    %v475 = vunpack.c.l.b16 %v99
    %v476 = vunpack.c.h.b16 %v99
    %v477 = vunpack.c.l.b16 %v100
    %v478 = vunpack.c.h.b16 %v100
    %v479 = vunpack.c.l.b16 %v101
    %v480 = vunpack.c.h.b16 %v101
    %v481 = vunpack.c.l.b16 %v102
    %v482 = vunpack.c.h.b16 %v102
    %v483 = vunpack.c.l.b16 %v103
    %v484 = vunpack.c.h.b16 %v103
    %v485 = vunpack.c.l.b16 %v104
    %v486 = vunpack.c.h.b16 %v104
    %v487 = vunpack.c.l.b16 %v105
    %v488 = vunpack.c.h.b16 %v105
    %v489 = vunpack.c.l.b16 %v106
    %v490 = vunpack.c.h.b16 %v106
    %v491 = vunpack.c.l.b16 %v107
    %v492 = vunpack.c.h.b16 %v107
    %v493 = vunpack.c.l.b16 %v108
    %v494 = vunpack.c.h.b16 %v108
    %v495 = vunpack.c.l.b16 %v109
    %v496 = vunpack.c.h.b16 %v109
    %v497 = vunpack.c.l.b16 %v110
    %v498 = vunpack.c.h.b16 %v110
    %v499 = vunpack.c.l.b16 %v111
    %v500 = vunpack.c.h.b16 %v111
    %v501 = vunpack.c.l.b16 %v112
    %v502 = vunpack.c.h.b16 %v112
    %v503 = vunpack.c.l.b16 %v113
    %v504 = vunpack.c.h.b16 %v113
    %v505 = vunpack.c.l.b16 %v114
    %v506 = vunpack.c.h.b16 %v114
    %v507 = vunpack.c.l.b16 %v115
    %v508 = vunpack.c.h.b16 %v115
    %v509 = vunpack.c.l.b16 %v116
    %v510 = vunpack.c.h.b16 %v116
    %v511 = vunpack.c.l.b16 %v117
    %v512 = vunpack.c.h.b16 %v117
    %v513 = vunpack.c.l.b16 %v118
    %v514 = vunpack.c.h.b16 %v118
    %v515 = vunpack.c.l.b16 %v119
    %v516 = vunpack.c.h.b16 %v119
    %v517 = vunpack.c.l.b16 %v120
    %v518 = vunpack.c.h.b16 %v120
    %v519 = vunpack.c.l.b16 %v121
    %v520 = vunpack.c.h.b16 %v121
    %v521 = vunpack.c.l.b16 %v122
    %v522 = vunpack.c.h.b16 %v122
    %v523 = vunpack.c.l.b16 %v123
    %v524 = vunpack.c.h.b16 %v123
    %v525 = vunpack.c.l.b16 %v124
    %v526 = vunpack.c.h.b16 %v124
    %v527 = vunpack.c.l.b16 %v125
    %v528 = vunpack.c.h.b16 %v125
    %v529 = vunpack.c.l.b16 %v126
    %v530 = vunpack.c.h.b16 %v126
    %v531 = vunpack.c.l.b16 %v127
    %v532 = vunpack.c.h.b16 %v127
    %v533 = vunpack.c.l.b16 %v128
    %v534 = vunpack.c.h.b16 %v128
    %v535 = vunpack.c.l.b16 %v129
    %v536 = vunpack.c.h.b16 %v129
    %v537 = vunpack.c.l.b16 %v130
    %v538 = vunpack.c.h.b16 %v130
    %v539 = vunpack.c.l.b16 %v131
    %v540 = vunpack.c.h.b16 %v131
    %v541 = vunpack.c.l.b16 %v132
    %v542 = vunpack.c.h.b16 %v132
    %v543 = vunpack.c.l.b16 %v133
    %v544 = vunpack.c.h.b16 %v133
    %v545 = vunpack.c.l.b16 %v134
    %v546 = vunpack.c.h.b16 %v134
    %v547 = vunpack.c.l.b16 %v135
    %v548 = vunpack.c.h.b16 %v135
    %v549 = vunpack.c.l.b16 %v136
    %v550 = vunpack.c.h.b16 %v136
    %v551 = vunpack.c.l.b16 %v137
    %v552 = vunpack.c.h.b16 %v137
    %v553 = vunpack.c.l.b16 %v138
    %v554 = vunpack.c.h.b16 %v138
    %v555 = vunpack.c.l.b16 %v139
    %v556 = vunpack.c.h.b16 %v139
    %v557 = vunpack.c.l.b16 %v140
    %v558 = vunpack.c.h.b16 %v140
    %v559 = vunpack.c.l.b16 %v141
    %v560 = vunpack.c.h.b16 %v141
    %v561 = vunpack.c.l.b16 %v142
    %v562 = vunpack.c.h.b16 %v142
    %v563 = vunpack.c.l.b16 %v143
    %v564 = vunpack.c.h.b16 %v143
    %v565 = vunpack.c.l.b16 %v144
    %v566 = vunpack.c.h.b16 %v144
    %v567 = vunpack.c.l.b16 %v145
    %v568 = vunpack.c.h.b16 %v145
    %v569 = vunpack.c.l.b16 %v146
    %v570 = vunpack.c.h.b16 %v146
    %v571 = vunpack.c.l.b16 %v147
    %v572 = vunpack.c.h.b16 %v147
    %v573 = vunpack.c.l.b16 %v148
    %v574 = vunpack.c.h.b16 %v148
    %v575 = vunpack.c.l.b16 %v149
    %v576 = vunpack.c.h.b16 %v149
    %v577 = vunpack.c.l.b16 %v150
    %v578 = vunpack.c.h.b16 %v150
    %v579 = vunpack.c.l.b16 %v151
    %v580 = vunpack.c.h.b16 %v151
    %v581 = vunpack.c.l.b16 %v152
    %v582 = vunpack.c.h.b16 %v152
    %v583 = vunpack.c.l.b16 %v153
    %v584 = vunpack.c.h.b16 %v153
    %v585 = vunpack.c.l.b16 %v154
    %v586 = vunpack.c.h.b16 %v154
    %v587 = vunpack.c.l.b16 %v155
    %v588 = vunpack.c.h.b16 %v155
    %v589 = vunpack.c.l.b16 %v156
    %v590 = vunpack.c.h.b16 %v156
    %v591 = vunpack.c.l.b16 %v157
    %v592 = vunpack.c.h.b16 %v157
    %v593 = vunpack.c.l.b16 %v158
    %v594 = vunpack.c.h.b16 %v158
    %v595 = vunpack.c.l.b16 %v159
    %v596 = vunpack.c.h.b16 %v159
    %v597 = vunpack.c.l.b16 %v160
    %v598 = vunpack.c.h.b16 %v160
    %v599 = vunpack.c.l.b16 %v161
    %v600 = vunpack.c.h.b16 %v161
    %v601 = vunpack.c.l.b16 %v162
    %v602 = vunpack.c.h.b16 %v162
    %v603 = vunpack.c.l.b16 %v163
    %v604 = vunpack.c.h.b16 %v163
    %v605 = vunpack.c.l.b16 %v164
    %v606 = vunpack.c.h.b16 %v164
    %v607 = vunpack.c.l.b16 %v165
    %v608 = vunpack.c.h.b16 %v165
    %v609 = vunpack.c.l.b16 %v166
    %v610 = vunpack.c.h.b16 %v166
    %v611 = vunpack.c.l.b16 %v167
    %v612 = vunpack.c.h.b16 %v167
    %v613 = vunpack.c.l.b16 %v168
    %v614 = vunpack.c.h.b16 %v168
    %v615 = vunpack.c.l.b16 %v169
    %v616 = vunpack.c.h.b16 %v169
    %v617 = vunpack.c.l.b16 %v170
    %v618 = vunpack.c.h.b16 %v170
    %v619 = vunpack.c.l.b16 %v171
    %v620 = vunpack.c.h.b16 %v171
    %v621 = vunpack.c.l.b16 %v172
    %v622 = vunpack.c.h.b16 %v172
    %v623 = vunpack.c.l.b16 %v173
    %v624 = vunpack.c.h.b16 %v173
    %v625 = vunpack.c.l.b16 %v174
    %v626 = vunpack.c.h.b16 %v174
    %v627 = vunpack.c.l.b16 %v175
    %v628 = vunpack.c.h.b16 %v175
    %v629 = vunpack.c.l.b16 %v176
    %v630 = vunpack.c.h.b16 %v176
    %v631 = vunpack.c.l.b16 %v177
    %v632 = vunpack.c.h.b16 %v177
    %v633 = vunpack.c.l.b16 %v178
    %v634 = vunpack.c.h.b16 %v178
    %v635 = vunpack.c.l.b16 %v179
    %v636 = vunpack.c.h.b16 %v179
    %v637 = vunpack.c.l.b16 %v180
    %v638 = vunpack.c.h.b16 %v180
    %v639 = vunpack.c.l.b16 %v181
    %v640 = vunpack.c.h.b16 %v181
    %v641 = vunpack.c.l.b16 %v182
    %v642 = vunpack.c.h.b16 %v182
    %v643 = vunpack.c.l.b16 %v183
    %v644 = vunpack.c.h.b16 %v183
    %v645 = vunpack.c.l.b16 %v184
    %v646 = vunpack.c.h.b16 %v184
    %v647 = vunpack.c.l.b16 %v185
    %v648 = vunpack.c.h.b16 %v185
    %v649 = vunpack.c.l.b16 %v186
    %v650 = vunpack.c.h.b16 %v186
    %v651 = vpack.c.b16 %v397, %v395
    %v652 = vpack.c.b16 %v398, %v396
    %v653 = vpack.c.b16 %v401, %v399
    %v654 = vpack.c.b16 %v402, %v400
    %v655 = vpack.c.b16 %v405, %v403
    %v656 = vpack.c.b16 %v406, %v404
    %v657 = vpack.c.b16 %v409, %v407
    %v658 = vpack.c.b16 %v410, %v408
    %v659 = vpack.c.b16 %v413, %v411
    %v660 = vpack.c.b16 %v414, %v412
    %v661 = vpack.c.b16 %v417, %v415
    %v662 = vpack.c.b16 %v418, %v416
    %v663 = vpack.c.b16 %v421, %v419
    %v664 = vpack.c.b16 %v422, %v420
    %v665 = vpack.c.b16 %v425, %v423
    %v666 = vpack.c.b16 %v426, %v424
    %v667 = vpack.c.b16 %v429, %v427
    %v668 = vpack.c.b16 %v430, %v428
    %v669 = vpack.c.b16 %v433, %v431
    %v670 = vpack.c.b16 %v434, %v432
    %v671 = vpack.c.b16 %v437, %v435
    %v672 = vpack.c.b16 %v438, %v436
    %v673 = vpack.c.b16 %v441, %v439
    %v674 = vpack.c.b16 %v442, %v440
    %v675 = vpack.c.b16 %v445, %v443
    %v676 = vpack.c.b16 %v446, %v444
    %v677 = vpack.c.b16 %v449, %v447
    %v678 = vpack.c.b16 %v450, %v448
    %v679 = vpack.c.b16 %v453, %v451
    %v680 = vpack.c.b16 %v454, %v452
    %v681 = vpack.c.b16 %v457, %v455
    %v682 = vpack.c.b16 %v458, %v456
    %v683 = vpack.c.b16 %v461, %v459
    %v684 = vpack.c.b16 %v462, %v460
    %v685 = vpack.c.b16 %v465, %v463
    %v686 = vpack.c.b16 %v466, %v464
    %v687 = vpack.c.b16 %v469, %v467
    %v688 = vpack.c.b16 %v470, %v468
    %v689 = vpack.c.b16 %v473, %v471
    %v690 = vpack.c.b16 %v474, %v472
    %v691 = vpack.c.b16 %v477, %v475
    %v692 = vpack.c.b16 %v478, %v476
    %v693 = vpack.c.b16 %v481, %v479
    %v694 = vpack.c.b16 %v482, %v480
    %v695 = vpack.c.b16 %v485, %v483
    %v696 = vpack.c.b16 %v486, %v484
    %v697 = vpack.c.b16 %v489, %v487
    %v698 = vpack.c.b16 %v490, %v488
    %v699 = vpack.c.b16 %v493, %v491
    %v700 = vpack.c.b16 %v494, %v492
    %v701 = vpack.c.b16 %v497, %v495
    %v702 = vpack.c.b16 %v498, %v496
    %v703 = vpack.c.b16 %v501, %v499
    %v704 = vpack.c.b16 %v502, %v500
    %v705 = vpack.c.b16 %v505, %v503
    %v706 = vpack.c.b16 %v506, %v504
    %v707 = vpack.c.b16 %v509, %v507
    %v708 = vpack.c.b16 %v510, %v508
    %v709 = vpack.c.b16 %v513, %v511
    %v710 = vpack.c.b16 %v514, %v512
    %v711 = vpack.c.b16 %v517, %v515
    %v712 = vpack.c.b16 %v518, %v516
    %v713 = vpack.c.b16 %v521, %v519
    %v714 = vpack.c.b16 %v522, %v520
    %v715 = vpack.c.b16 %v525, %v523
    %v716 = vpack.c.b16 %v526, %v524
    %v717 = vpack.c.b16 %v529, %v527
    %v718 = vpack.c.b16 %v530, %v528
    %v719 = vpack.c.b16 %v533, %v531
    %v720 = vpack.c.b16 %v534, %v532
    %v721 = vpack.c.b16 %v537, %v535
    %v722 = vpack.c.b16 %v538, %v536
    %v723 = vpack.c.b16 %v541, %v539
    %v724 = vpack.c.b16 %v542, %v540
    %v725 = vpack.c.b16 %v545, %v543
    %v726 = vpack.c.b16 %v546, %v544
    %v727 = vpack.c.b16 %v549, %v547
    %v728 = vpack.c.b16 %v550, %v548
    %v729 = vpack.c.b16 %v553, %v551
    %v730 = vpack.c.b16 %v554, %v552
    %v731 = vpack.c.b16 %v557, %v555
    %v732 = vpack.c.b16 %v558, %v556
    %v733 = vpack.c.b16 %v561, %v559
    %v734 = vpack.c.b16 %v562, %v560
    %v735 = vpack.c.b16 %v565, %v563
    %v736 = vpack.c.b16 %v566, %v564
    %v737 = vpack.c.b16 %v569, %v567
    %v738 = vpack.c.b16 %v570, %v568
    %v739 = vpack.c.b16 %v573, %v571
    %v740 = vpack.c.b16 %v574, %v572
    %v741 = vpack.c.b16 %v577, %v575
    %v742 = vpack.c.b16 %v578, %v576
    %v743 = vpack.c.b16 %v581, %v579
    %v744 = vpack.c.b16 %v582, %v580
    %v745 = vpack.c.b16 %v585, %v583
    %v746 = vpack.c.b16 %v586, %v584
    %v747 = vpack.c.b16 %v589, %v587
    %v748 = vpack.c.b16 %v590, %v588
    %v749 = vpack.c.b16 %v593, %v591
    %v750 = vpack.c.b16 %v594, %v592
    %v751 = vpack.c.b16 %v597, %v595
    %v752 = vpack.c.b16 %v598, %v596
    %v753 = vpack.c.b16 %v601, %v599
    %v754 = vpack.c.b16 %v602, %v600
    %v755 = vpack.c.b16 %v605, %v603
    %v756 = vpack.c.b16 %v606, %v604
    %v757 = vpack.c.b16 %v609, %v607
    %v758 = vpack.c.b16 %v610, %v608
    %v759 = vpack.c.b16 %v613, %v611
    %v760 = vpack.c.b16 %v614, %v612
    %v761 = vpack.c.b16 %v617, %v615
    %v762 = vpack.c.b16 %v618, %v616
    %v763 = vpack.c.b16 %v621, %v619
    %v764 = vpack.c.b16 %v622, %v620
    %v765 = vpack.c.b16 %v625, %v623
    %v766 = vpack.c.b16 %v626, %v624
    %v767 = vpack.c.b16 %v629, %v627
    %v768 = vpack.c.b16 %v630, %v628
    %v769 = vpack.c.b16 %v633, %v631
    %v770 = vpack.c.b16 %v634, %v632
    %v771 = vpack.c.b16 %v637, %v635
    %v772 = vpack.c.b16 %v638, %v636
    %v773 = vpack.c.b16 %v641, %v639
    %v774 = vpack.c.b16 %v642, %v640
    %v775 = vpack.c.b16 %v645, %v643
    %v776 = vpack.c.b16 %v646, %v644
    %v777 = vpack.c.b16 %v649, %v647
    %v778 = vpack.c.b16 %v650, %v648
    %907 = vmatprep.subr.bf16.mxu0 %v652
    %908 = vmatpush1.bf16.msra.mxu0 %v651
    %909 = vmatprep.subr.bf16.mxu0 %v654
    %910 = vmatpush1.bf16.msra.mxu0 %v653
    %911 = vmatprep.subr.bf16.mxu0 %v656
    %912 = vmatpush1.bf16.msra.mxu0 %v655
    %913 = vmatprep.subr.bf16.mxu0 %v658
    %914 = vmatpush1.bf16.msra.mxu0 %v657
    %915 = vmatprep.subr.bf16.mxu0 %v660
    %916 = vmatpush1.bf16.msra.mxu0 %v659
    %917 = vmatprep.subr.bf16.mxu0 %v662
    %918 = vmatpush1.bf16.msra.mxu0 %v661
    %919 = vmatprep.subr.bf16.mxu0 %v664
    %920 = vmatpush1.bf16.msra.mxu0 %v663
    %921 = vmatprep.subr.bf16.mxu0 %v666
    %922 = vmatpush1.bf16.msra.mxu0 %v665
    %923 = vmatprep.subr.bf16.mxu0 %v668
    %924 = vmatpush1.bf16.msra.mxu0 %v667
    %925 = vmatprep.subr.bf16.mxu0 %v670
    %926 = vmatpush1.bf16.msra.mxu0 %v669
    %927 = vmatprep.subr.bf16.mxu0 %v672
    %928 = vmatpush1.bf16.msra.mxu0 %v671
    %929 = vmatprep.subr.bf16.mxu0 %v674
    %930 = vmatpush1.bf16.msra.mxu0 %v673
    %931 = vmatprep.subr.bf16.mxu0 %v676
    %932 = vmatpush1.bf16.msra.mxu0 %v675
    %933 = vmatprep.subr.bf16.mxu0 %v678
    %934 = vmatpush1.bf16.msra.mxu0 %v677
    %935 = vmatprep.subr.bf16.mxu0 %v680
    %936 = vmatpush1.bf16.msra.mxu0 %v679
    %937 = vmatprep.subr.bf16.mxu0 %v682
    %938 = vmatpush1.bf16.msra.mxu0 %v681
    %939 = vmatprep.mubr.bf16.mxu0 %v236
    %940 = vmatmul.mubr.bf16.gmra.mrb[0].mxu0 %v235
    %v941 = vpop.f32.mrb[0].mxu0
    %v942 = vadd.f32 0.0, %v941
    %v943 = vpop.f32.mrb[0].mxu0
    %v944 = vadd.f32 0.0, %v943
    %v945 = vpop.f32.mrb[0].mxu0
    %v946 = vadd.f32 0.0, %v945
    %v947 = vpop.f32.mrb[0].mxu0
    %v948 = vadd.f32 0.0, %v947
    %949 = vmatprep.mubr.bf16.mxu0 %v244
    %950 = vmatmul.mubr.bf16.gmra.mrb[0].mxu0 %v243
    %v951 = vpop.f32.mrb[0].mxu0
    %v952 = vadd.f32 0.0, %v951
    %v953 = vpop.f32.mrb[0].mxu0
    %v954 = vadd.f32 0.0, %v953
    %v955 = vpop.f32.mrb[0].mxu0
    %v956 = vadd.f32 0.0, %v955
    %v957 = vpop.f32.mrb[0].mxu0
    %v958 = vadd.f32 0.0, %v957
    %959 = vdwg.mxu0
    %960 = vmatprep.subr.bf16.mxu0 %v684
    %961 = vmatpush1.bf16.msra.mxu0 %v683
    %962 = vmatprep.subr.bf16.mxu0 %v686
    %963 = vmatpush1.bf16.msra.mxu0 %v685
    %964 = vmatprep.subr.bf16.mxu0 %v688
    %965 = vmatpush1.bf16.msra.mxu0 %v687
    %966 = vmatprep.subr.bf16.mxu0 %v690
    %967 = vmatpush1.bf16.msra.mxu0 %v689
    %968 = vmatprep.subr.bf16.mxu0 %v692
    %969 = vmatpush1.bf16.msra.mxu0 %v691
    %970 = vmatprep.subr.bf16.mxu0 %v694
    %971 = vmatpush1.bf16.msra.mxu0 %v693
    %972 = vmatprep.subr.bf16.mxu0 %v696
    %973 = vmatpush1.bf16.msra.mxu0 %v695
    %974 = vmatprep.subr.bf16.mxu0 %v698
    %975 = vmatpush1.bf16.msra.mxu0 %v697
    %976 = vmatprep.subr.bf16.mxu0 %v700
    %977 = vmatpush1.bf16.msra.mxu0 %v699
    %978 = vmatprep.subr.bf16.mxu0 %v702
    %979 = vmatpush1.bf16.msra.mxu0 %v701
    %980 = vmatprep.subr.bf16.mxu0 %v704
    %981 = vmatpush1.bf16.msra.mxu0 %v703
    %982 = vmatprep.subr.bf16.mxu0 %v706
    %983 = vmatpush1.bf16.msra.mxu0 %v705
    %984 = vmatprep.subr.bf16.mxu0 %v708
    %985 = vmatpush1.bf16.msra.mxu0 %v707
    %986 = vmatprep.subr.bf16.mxu0 %v710
    %987 = vmatpush1.bf16.msra.mxu0 %v709
    %988 = vmatprep.subr.bf16.mxu0 %v712
    %989 = vmatpush1.bf16.msra.mxu0 %v711
    %990 = vmatprep.subr.bf16.mxu0 %v714
    %991 = vmatpush1.bf16.msra.mxu0 %v713
    %992 = vmatprep.mubr.bf16.mxu0 %v238
    %993 = vmatmul.mubr.bf16.gmra.mrb[0].mxu0 %v237
    %v994 = vpop.f32.mrb[0].mxu0
    %v995 = vadd.f32 %v942, %v994
    %v996 = vpop.f32.mrb[0].mxu0
    %v997 = vadd.f32 %v944, %v996
    %v998 = vpop.f32.mrb[0].mxu0
    %v999 = vadd.f32 %v946, %v998
    %v1000 = vpop.f32.mrb[0].mxu0
    %v1001 = vadd.f32 %v948, %v1000
    %1002 = vmatprep.mubr.bf16.mxu0 %v246
    %1003 = vmatmul.mubr.bf16.gmra.mrb[0].mxu0 %v245
    %v1004 = vpop.f32.mrb[0].mxu0
    %v1005 = vadd.f32 %v952, %v1004
    %v1006 = vpop.f32.mrb[0].mxu0
    %v1007 = vadd.f32 %v954, %v1006
    %v1008 = vpop.f32.mrb[0].mxu0
    %v1009 = vadd.f32 %v956, %v1008
    %v1010 = vpop.f32.mrb[0].mxu0
    %v1011 = vadd.f32 %v958, %v1010
    %1012 = vdwg.mxu0
    %1013 = vmatprep.subr.bf16.mxu0 %v716
    %1014 = vmatpush1.bf16.msra.mxu0 %v715
    %1015 = vmatprep.subr.bf16.mxu0 %v718
    %1016 = vmatpush1.bf16.msra.mxu0 %v717
    %1017 = vmatprep.subr.bf16.mxu0 %v720
    %1018 = vmatpush1.bf16.msra.mxu0 %v719
    %1019 = vmatprep.subr.bf16.mxu0 %v722
    %1020 = vmatpush1.bf16.msra.mxu0 %v721
    %1021 = vmatprep.subr.bf16.mxu0 %v724
    %1022 = vmatpush1.bf16.msra.mxu0 %v723
    %1023 = vmatprep.subr.bf16.mxu0 %v726
    %1024 = vmatpush1.bf16.msra.mxu0 %v725
    %1025 = vmatprep.subr.bf16.mxu0 %v728
    %1026 = vmatpush1.bf16.msra.mxu0 %v727
    %1027 = vmatprep.subr.bf16.mxu0 %v730
    %1028 = vmatpush1.bf16.msra.mxu0 %v729
    %1029 = vmatprep.subr.bf16.mxu0 %v732
    %1030 = vmatpush1.bf16.msra.mxu0 %v731
    %1031 = vmatprep.subr.bf16.mxu0 %v734
    %1032 = vmatpush1.bf16.msra.mxu0 %v733
    %1033 = vmatprep.subr.bf16.mxu0 %v736
    %1034 = vmatpush1.bf16.msra.mxu0 %v735
    %1035 = vmatprep.subr.bf16.mxu0 %v738
    %1036 = vmatpush1.bf16.msra.mxu0 %v737
    %1037 = vmatprep.subr.bf16.mxu0 %v740
    %1038 = vmatpush1.bf16.msra.mxu0 %v739
    %1039 = vmatprep.subr.bf16.mxu0 %v742
    %1040 = vmatpush1.bf16.msra.mxu0 %v741
    %1041 = vmatprep.subr.bf16.mxu0 %v744
    %1042 = vmatpush1.bf16.msra.mxu0 %v743
    %1043 = vmatprep.subr.bf16.mxu0 %v746
    %1044 = vmatpush1.bf16.msra.mxu0 %v745
    %1045 = vmatprep.mubr.bf16.mxu0 %v240
    %1046 = vmatmul.mubr.bf16.gmra.mrb[0].mxu0 %v239
    %v1047 = vpop.f32.mrb[0].mxu0
    %v1048 = vadd.f32 %v995, %v1047
    %v1049 = vpop.f32.mrb[0].mxu0
    %v1050 = vadd.f32 %v997, %v1049
    %v1051 = vpop.f32.mrb[0].mxu0
    %v1052 = vadd.f32 %v999, %v1051
    %v1053 = vpop.f32.mrb[0].mxu0
    %v1054 = vadd.f32 %v1001, %v1053
    %1055 = vmatprep.mubr.bf16.mxu0 %v248
    %1056 = vmatmul.mubr.bf16.gmra.mrb[0].mxu0 %v247
    %v1057 = vpop.f32.mrb[0].mxu0
    %v1058 = vadd.f32 %v1005, %v1057
    %v1059 = vpop.f32.mrb[0].mxu0
    %v1060 = vadd.f32 %v1007, %v1059
    %v1061 = vpop.f32.mrb[0].mxu0
    %v1062 = vadd.f32 %v1009, %v1061
    %v1063 = vpop.f32.mrb[0].mxu0
    %v1064 = vadd.f32 %v1011, %v1063
    %1065 = vdwg.mxu0
    %1066 = vmatprep.subr.bf16.mxu0 %v748
    %1067 = vmatpush1.bf16.msra.mxu0 %v747
    %1068 = vmatprep.subr.bf16.mxu0 %v750
    %1069 = vmatpush1.bf16.msra.mxu0 %v749
    %1070 = vmatprep.subr.bf16.mxu0 %v752
    %1071 = vmatpush1.bf16.msra.mxu0 %v751
    %1072 = vmatprep.subr.bf16.mxu0 %v754
    %1073 = vmatpush1.bf16.msra.mxu0 %v753
    %1074 = vmatprep.subr.bf16.mxu0 %v756
    %1075 = vmatpush1.bf16.msra.mxu0 %v755
    %1076 = vmatprep.subr.bf16.mxu0 %v758
    %1077 = vmatpush1.bf16.msra.mxu0 %v757
    %1078 = vmatprep.subr.bf16.mxu0 %v760
    %1079 = vmatpush1.bf16.msra.mxu0 %v759
    %1080 = vmatprep.subr.bf16.mxu0 %v762
    %1081 = vmatpush1.bf16.msra.mxu0 %v761
    %1082 = vmatprep.subr.bf16.mxu0 %v764
    %1083 = vmatpush1.bf16.msra.mxu0 %v763
    %1084 = vmatprep.subr.bf16.mxu0 %v766
    %1085 = vmatpush1.bf16.msra.mxu0 %v765
    %1086 = vmatprep.subr.bf16.mxu0 %v768
    %1087 = vmatpush1.bf16.msra.mxu0 %v767
    %1088 = vmatprep.subr.bf16.mxu0 %v770
    %1089 = vmatpush1.bf16.msra.mxu0 %v769
    %1090 = vmatprep.subr.bf16.mxu0 %v772
    %1091 = vmatpush1.bf16.msra.mxu0 %v771
    %1092 = vmatprep.subr.bf16.mxu0 %v774
    %1093 = vmatpush1.bf16.msra.mxu0 %v773
    %1094 = vmatprep.subr.bf16.mxu0 %v776
    %1095 = vmatpush1.bf16.msra.mxu0 %v775
    %1096 = vmatprep.subr.bf16.mxu0 %v778
    %1097 = vmatpush1.bf16.msra.mxu0 %v777
    %1098 = vmatprep.mubr.bf16.mxu0 %v242
    %1099 = vmatmul.mubr.bf16.gmra.mrb[0].mxu0 %v241
    %v1100 = vpop.f32.mrb[0].mxu0
    %v1101 = vadd.f32 %v1048, %v1100
    %v1102 = vpop.f32.mrb[0].mxu0
    %v1103 = vadd.f32 %v1050, %v1102
    %v1104 = vpop.f32.mrb[0].mxu0
    %v1105 = vadd.f32 %v1052, %v1104
    %v1106 = vpop.f32.mrb[0].mxu0
    %v1107 = vadd.f32 %v1054, %v1106
    %1108 = vmatprep.mubr.bf16.mxu0 %v250
    %1109 = vmatmul.mubr.bf16.gmra.mrb[0].mxu0 %v249
    %v1110 = vpop.f32.mrb[0].mxu0
    %v1111 = vadd.f32 %v1058, %v1110
    %v1112 = vpop.f32.mrb[0].mxu0
    %v1113 = vadd.f32 %v1060, %v1112
    %v1114 = vpop.f32.mrb[0].mxu0
    %v1115 = vadd.f32 %v1062, %v1114
    %v1116 = vpop.f32.mrb[0].mxu0
    %v1117 = vadd.f32 %v1064, %v1116
    %1118 = vdwg.mxu0
    %v1119 = vpack.c.bf16 %v1105, %v1101
    %v1120 = vpack.c.bf16 %v1107, %v1103
    %v1121 = vpack.c.bf16 %v1115, %v1111
    %v1122 = vpack.c.bf16 %v1117, %v1113
    %v1127 = vunpack.c.l.b16 %v1119
    %v1128 = vunpack.c.l.b16 %v1120
    %v1129 = vunpack.c.h.b16 %v1119
    %v1130 = vunpack.c.h.b16 %v1120
    %v1131 = vunpack.c.l.b16 %v1121
    %v1132 = vunpack.c.l.b16 %v1122
    %v1133 = vunpack.c.h.b16 %v1121
    %v1134 = vunpack.c.h.b16 %v1122
    %v1135 = vpack.c.b16 %v1128, %v1127
    %v1136 = vpack.c.b16 %v1130, %v1129
    %v1137 = vpack.c.b16 %v1132, %v1131
    %v1138 = vpack.c.b16 %v1134, %v1133
    %1143 = vst [vmem:[#allocation7] sm:$0xff] %v1135
    %1144 = vst [vmem:[#allocation7 + $0x8] sm:$0xff] %v1136
    %1145 = vst [vmem:[#allocation7 + $0x10] sm:$0xff] %v1137
    %1146 = vst [vmem:[#allocation7 + $0x18] sm:$0xff] %v1138
    %v1147 = vadd.f32 %v1101, %v1105
    %v1148 = vadd.f32 %v1147, %v1111
    %v1149 = vadd.f32 %v1148, %v1115
    %v1150 = vrot.slane %v1149, 4
    %v1151 = vadd.f32 %v1149, %v1150
    %v1152 = vrot.slane %v1151, 2
    %v1153 = vadd.f32 %v1151, %v1152
    %v1154 = vrot.slane %v1153, 1
    %v1155 = vadd.f32 %v1153, %v1154
    %v1156 = vadd.f32 %v1103, %v1107
    %v1157 = vadd.f32 %v1156, %v1113
    %v1158 = vadd.f32 %v1157, %v1117
    %v1159 = vrot.slane %v1158, 4
    %v1160 = vadd.f32 %v1158, %v1159
    %v1161 = vrot.slane %v1160, 2
    %v1162 = vadd.f32 %v1160, %v1161
    %v1163 = vrot.slane %v1162, 1
    %v1164 = vadd.f32 %v1162, %v1163
    %v1165 = vmul.f32 %v1101, %v1101
    %v1166 = vmul.f32 %v1103, %v1103
    %v1167 = vmul.f32 %v1105, %v1105
    %v1168 = vmul.f32 %v1107, %v1107
    %v1169 = vmul.f32 %v1111, %v1111
    %v1170 = vmul.f32 %v1113, %v1113
    %v1171 = vmul.f32 %v1115, %v1115
    %v1172 = vmul.f32 %v1117, %v1117
    %v1173 = vadd.f32 %v1165, %v1167
    %v1174 = vadd.f32 %v1173, %v1169
    %v1175 = vadd.f32 %v1174, %v1171
    %v1176 = vrot.slane %v1175, 4
    %v1177 = vadd.f32 %v1175, %v1176
    %v1178 = vrot.slane %v1177, 2
    %v1179 = vadd.f32 %v1177, %v1178
    %v1180 = vrot.slane %v1179, 1
    %v1181 = vadd.f32 %v1179, %v1180
    %v1182 = vadd.f32 %v1166, %v1168
    %v1183 = vadd.f32 %v1182, %v1170
    %v1184 = vadd.f32 %v1183, %v1172
    %v1185 = vrot.slane %v1184, 4
    %v1186 = vadd.f32 %v1184, %v1185
    %v1187 = vrot.slane %v1186, 2
    %v1188 = vadd.f32 %v1186, %v1187
    %v1189 = vrot.slane %v1188, 1
    %v1190 = vadd.f32 %v1188, %v1189
    %v1191 = vlaneseq
    %v1192 = vshrl.u32 %v1191, 7
    %vm1193 = vcmp.eq.s32.totalorder %v1192, 0
    %v1194 = vsel %vm1193, %v1155, 0.0
    %v1195 = vsel %vm1193, %v1164, 0.0
    %vm1196 = vcmp.eq.s32.totalorder %v1192, 1
    %v1197 = vsel %vm1196, %v1181, 0.0
    %v1198 = vsel %vm1196, %v1190, 0.0
    %v1199 = vadd.f32 %v1194, %v1197
    %v1200 = vadd.f32 %v1195, %v1198
    %1201 = vst [vmem:[#allocation8] sm:$0xff] %v1199
    %1202 = vst [vmem:[#allocation8 + $0x8] sm:$0xff] %v1200
    // Predicated region
    $region18: #{tpu_custom_call.1} parent=1 // pred_check
      _
    $region19: #{tpu_custom_call.1} parent=1 // pred_check_branch
      %1204 = sbr.rel (0) target = $region21
    $region20: #{tpu_custom_call.1} parent=1 // pred_region
      %s1206 = ssub.s32 512, 512
      %1207 = vsyncadd [#allocation4], %s1206
      %s1208 = sshll.u32 [#allocation7], 4
      %s1209 = int_to_ptr.vmem [resolvable:$true] %s1208
      %1214 = dma.vmem_to_hbm [thread:$0]  %s1209, 512, %s2, [#allocation4], 128, 128, 8
    $region21: #{tpu_custom_call.1} parent=1 // pred_fallthru
      _
    // Predicated region
    $region22: #{tpu_custom_call.1} parent=1 // pred_check
      _
    $region23: #{tpu_custom_call.1} parent=1 // pred_check_branch
      %1216 = sbr.rel (0) target = $region25
    $region24: #{tpu_custom_call.1} parent=1 // pred_region
      %s1218 = ssub.s32 256, 256
      %1219 = vsyncadd [#allocation9], %s1218
      %s1221 = sshll.u32 [#allocation8], 4
      %s1222 = int_to_ptr.vmem [resolvable:$true] %s1221
      %1224 = dma.vmem_to_hbm [thread:$0]  %s1222, 256, %s3, [#allocation9]
    $region25: #{tpu_custom_call.1} parent=1 // pred_fallthru
      _
    // Predicated region
    $region26: #{tpu_custom_call.1} parent=1 // pred_check
      _
    $region27: #{tpu_custom_call.1} parent=1 // pred_check_branch
      %1226 = sbr.rel (0) target = $region29
    $region28: #{tpu_custom_call.1} parent=1 // pred_region
      %1227 = dma.done [#allocation4], 512
    $region29: #{tpu_custom_call.1} parent=1 // pred_fallthru
      _
    // Predicated region
    $region30: #{tpu_custom_call.1} parent=1 // pred_check
      _
    $region31: #{tpu_custom_call.1} parent=1 // pred_check_branch
      %1229 = sbr.rel (0) target = $region33
    $region32: #{tpu_custom_call.1} parent=1 // pred_region
      %1230 = dma.done [#allocation9], 256
    $region33: #{tpu_custom_call.1} parent=1 // pred_fallthru
      _
    %1231 = vsyncpa [#allocation3], 1
    %1232 = vsyncpa [#allocation6], 1
    %1233 = vsyncpa [#allocation4], 1
    %1234 = vsyncpa [#allocation9], 1

</llo_original>
